<compile_context>
chip_gen: v7x
topology: tpu7x:2x2x1
jax: 0.10.0
libtpu: 0.0.40
codegen_flags: <defaults>
</compile_context>

<pallas_src>
import functools

import jax
import jax.numpy as jnp
from jax.experimental import pallas as pl
from jax.experimental.pallas import tpu as pltpu


_VMEM_LIMIT_BYTES = 32 * 1024 * 1024      # explicit scoped-VMEM limit (safe on v5e/v6e/v7x)
_TILE_BUDGET_BYTES = 16 * 1024 * 1024     # budget for the double-buffered f32 tiles


def _choose_rows(d, n_f32_buffers, max_rows=1024):
    """Largest row-tile (multiple of 8, capped) whose f32 buffers fit the budget."""
    rows = _TILE_BUDGET_BYTES // (n_f32_buffers * d * 4)
    rows = max(8, min(max_rows, rows))
    return (rows // 8) * 8


# ---------------------------------------------------------------------------
# Kernel 1: fit statistics (single pass, tiled over rows of X).
# ---------------------------------------------------------------------------
def _stats_kernel(X_ref, mean_ref, std_ref, inv_ref, sum_sc, sq_sc, *, n_rows):
    pid = pl.program_id(0)

    @pl.when(pid == 0)
    def _():
        sum_sc[...] = jnp.zeros_like(sum_sc)
        sq_sc[...] = jnp.zeros_like(sq_sc)

    X = X_ref[...]                                      # (TN, D) f32 tile
    sum_sc[...] += jnp.sum(X, axis=0, keepdims=True)    # sublane reduce, VPU only
    sq_sc[...] += jnp.sum(X * X, axis=0, keepdims=True)

    @pl.when(pid == pl.num_programs(0) - 1)
    def _():
        n = jnp.float32(n_rows)
        mean = sum_sc[...] / n
        # unbiased variance (torch.std default, ddof=1); n == 1 gives 0/0 = nan,
        # matching torch.  Clamp tiny negatives from f32 cancellation.
        var = (sq_sc[...] - n * mean * mean) / (n - jnp.float32(1.0))
        var = jnp.maximum(var, jnp.float32(0.0))
        std = jnp.sqrt(var)
        std = jnp.where(std < jnp.float32(1e-9), jnp.float32(1.0), std)
        mean_ref[...] = mean
        std_ref[...] = std
        inv_ref[...] = jnp.float32(1.0) / std            # once per feature, not per element


def fit_stats(X):
    X = jnp.asarray(X, jnp.float32)
    N, D = X.shape

    cap = _choose_rows(D, n_f32_buffers=2)               # X tile is the only big buffer
    if N <= cap:
        TN, N_pad = N, N                                 # single full-array block
    else:
        TN = cap                                         # multiple of 8
        N_pad = pl.cdiv(N, TN) * TN
    if N_pad != N:                                       # zero rows do not change sums
        X = jnp.pad(X, ((0, N_pad - N), (0, 0)))

    stat = jax.ShapeDtypeStruct((1, D), jnp.float32)
    mean, std, inv_std = pl.pallas_call(
        functools.partial(_stats_kernel, n_rows=N),
        out_shape=(stat, stat, stat),
        grid=(N_pad // TN,),
        in_specs=[pl.BlockSpec((TN, D), lambda i: (i, 0))],
        out_specs=(
            pl.BlockSpec((1, D), lambda i: (0, 0)),
            pl.BlockSpec((1, D), lambda i: (0, 0)),
            pl.BlockSpec((1, D), lambda i: (0, 0)),
        ),
        scratch_shapes=[
            pltpu.VMEM((1, D), jnp.float32),             # running sum
            pltpu.VMEM((1, D), jnp.float32),             # running sum of squares
        ],
        compiler_params=pltpu.CompilerParams(
            dimension_semantics=("arbitrary",),          # reduction axis
            vmem_limit_bytes=_VMEM_LIMIT_BYTES,
        ),
    )(X)
    return mean, std, inv_std


# ---------------------------------------------------------------------------
# Kernel 2: forward hot path -> (x - mean) * inv_std  (pure VPU sub + mul).
# ---------------------------------------------------------------------------
def _scale_kernel(x_ref, mean_ref, inv_ref, o_ref):
    o_ref[...] = (x_ref[...] - mean_ref[...]) * inv_ref[...]


def scale_forward(x, mean, inv_std):
    x = jnp.asarray(x, jnp.float32)
    B, D = x.shape

    # Lane-dense fold: if D < 128, pack `f` consecutive rows into the lane dim
    # so every store is a full 128-lane unmasked vst.
    f = (128 // D) if (D < 128 and 128 % D == 0) else 1
    D2 = D * f
    B2 = pl.cdiv(B, f)

    cap = _choose_rows(D2, n_f32_buffers=4)              # double-buffered in + out tiles
    if B2 <= cap:
        TB, B2_pad = B2, B2                              # single full-array block
    else:
        TB = cap                                         # multiple of 8
        B2_pad = pl.cdiv(B2, TB) * TB

    rows_total = B2_pad * f
    if rows_total != B:
        x = jnp.pad(x, ((0, rows_total - B), (0, 0)))    # padded rows sliced off below
    x2 = x.reshape(B2_pad, D2)
    mean2 = jnp.tile(mean, (1, f)) if f > 1 else mean
    inv2 = jnp.tile(inv_std, (1, f)) if f > 1 else inv_std

    out2 = pl.pallas_call(
        _scale_kernel,
        out_shape=jax.ShapeDtypeStruct((B2_pad, D2), jnp.float32),
        grid=(B2_pad // TB,),
        in_specs=[
            pl.BlockSpec((TB, D2), lambda i: (i, 0)),
            pl.BlockSpec((1, D2), lambda i: (0, 0)),     # VMEM-resident across grid
            pl.BlockSpec((1, D2), lambda i: (0, 0)),
        ],
        out_specs=pl.BlockSpec((TB, D2), lambda i: (i, 0)),
        compiler_params=pltpu.CompilerParams(
            dimension_semantics=("parallel",),           # megacore sharding on v7x
            vmem_limit_bytes=_VMEM_LIMIT_BYTES,
        ),
    )(x2, mean2, inv2)

    return out2.reshape(rows_total, D)[:B]


class StandardScaler:
    """JAX/Pallas port of the PyTorch StandardScaler module."""

    def __init__(self, X):
        self.mean, self.std, self.inv_std = fit_stats(X)     # each (1, D)

    def __call__(self, x):
        return scale_forward(x, self.mean, self.inv_std)

    def inverse(self, z):
        # not the hot path; plain JAX glue
        return jnp.asarray(z, jnp.float32) * self.std + self.mean

    # TODO(synk): torch's nn.Module._apply (device/dtype movement hook) has no
    # Pallas equivalent; JAX handles array placement outside the kernel.


if __name__ == "__main__":
    key = jax.random.PRNGKey(0)
    k1, k2, k3, k4 = jax.random.split(key, 4)

    # primary shapes, consistent with the module (fit data + forward batch)
    N, B, D = 64, 8, 32
    X = jax.random.normal(k1, (N, D), jnp.float32) * 3.0 + 1.5
    x = jax.random.normal(k2, (B, D), jnp.float32) * 3.0 + 1.5

    scaler = StandardScaler(X)
    out = jax.block_until_ready(scaler(x))

    ref_mean = jnp.mean(X, axis=0)
    ref_std = jnp.std(X, axis=0, ddof=1)
    ref_std = jnp.where(ref_std < 1e-9, 1.0, ref_std)
    ref = (x - ref_mean) / ref_std
    assert out.shape == (B, D)
    assert jnp.allclose(out, ref, atol=1e-5, rtol=1e-5)

    # secondary: non-divisible shapes exercising row padding + lane folding
    N2, B2, D2 = 50, 10, 32
    X2 = jax.random.normal(k3, (N2, D2), jnp.float32) * 2.0 + 0.5
    x2 = jax.random.normal(k4, (B2, D2), jnp.float32) * 2.0 + 0.5
    scaler2 = StandardScaler(X2)
    out2 = jax.block_until_ready(scaler2(x2))
    ref_mean2 = jnp.mean(X2, axis=0)
    ref_std2 = jnp.std(X2, axis=0, ddof=1)
    ref_std2 = jnp.where(ref_std2 < 1e-9, 1.0, ref_std2)
    ref2 = (x2 - ref_mean2) / ref_std2
    assert out2.shape == (B2, D2)
    assert jnp.allclose(out2, ref2, atol=1e-5, rtol=1e-5)

    # inverse round-trip (plain JAX glue)
    assert jnp.allclose(scaler.inverse(out), x, atol=1e-4, rtol=1e-4)

    print("KERNEL_OK")
</pallas_src>

<mosaic_0001>
module attributes {stable_mosaic.version = 11 : i64} {
  func.func @_stats_kernel(%arg0: i32, %arg1: memref<64x32xf32, #tpu.memory_space<vmem>>, %arg2: memref<1x32xf32, #tpu.memory_space<vmem>>, %arg3: memref<1x32xf32, #tpu.memory_space<vmem>>, %arg4: memref<1x32xf32, #tpu.memory_space<vmem>>, %arg5: memref<1x32xf32, #tpu.memory_space<vmem>>, %arg6: memref<1x32xf32, #tpu.memory_space<vmem>>) attributes {dimension_semantics = [#tpu.dimension_semantics<arbitrary>], iteration_bounds = array<i64: 1>, scalar_prefetch = 0 : i64, scratch_operands = 2 : i64, tpu.core_type = #tpu.core_type<tc>, window_params = [{transform_indices = @transform_0, window_bounds = array<i64: 64, 32>}, {pipeline_mode = #tpu.pipeline_mode<synchronous>, transform_indices = @transform_1, window_bounds = array<i64: 1, 32>}, {pipeline_mode = #tpu.pipeline_mode<synchronous>, transform_indices = @transform_2, window_bounds = array<i64: 1, 32>}, {pipeline_mode = #tpu.pipeline_mode<synchronous>, transform_indices = @transform_3, window_bounds = array<i64: 1, 32>}]} {
    %c0_i32 = arith.constant 0 : i32
    %0 = arith.cmpi eq, %arg0, %c0_i32 : i32
    %1 = arith.extui %0 : i1 to i32
    %c0_i32_0 = arith.constant 0 : i32
    %2 = arith.cmpi ne, %1, %c0_i32_0 : i32
    scf.if %2 {
      %cst_13 = arith.constant 0.000000e+00 : f32
      %18 = vector.broadcast %cst_13 : f32 to vector<1x32xf32>
      %c0_14 = arith.constant 0 : index
      %c0_15 = arith.constant 0 : index
      %19 = vector.load %arg5[%c0_14, %c0_15] : memref<1x32xf32, #tpu.memory_space<vmem>>, vector<1x32xf32>
      tpu.vector_store %arg5[%c0_14, %c0_15], %18 {strides = array<i32>} : memref<1x32xf32, #tpu.memory_space<vmem>>, vector<1x32xf32>,
      %cst_16 = arith.constant 0.000000e+00 : f32
      %20 = vector.broadcast %cst_16 : f32 to vector<1x32xf32>
      %c0_17 = arith.constant 0 : index
      %c0_18 = arith.constant 0 : index
      %21 = vector.load %arg6[%c0_17, %c0_18] : memref<1x32xf32, #tpu.memory_space<vmem>>, vector<1x32xf32>
      tpu.vector_store %arg6[%c0_17, %c0_18], %20 {strides = array<i32>} : memref<1x32xf32, #tpu.memory_space<vmem>>, vector<1x32xf32>,
    } else {
    }
    %c0 = arith.constant 0 : index
    %c0_1 = arith.constant 0 : index
    %3 = vector.load %arg1[%c0, %c0_1] : memref<64x32xf32, #tpu.memory_space<vmem>>, vector<64x32xf32>
    %c0_2 = arith.constant 0 : index
    %c0_3 = arith.constant 0 : index
    %4 = vector.load %arg5[%c0_2, %c0_3] : memref<1x32xf32, #tpu.memory_space<vmem>>, vector<1x32xf32>
    %cst = arith.constant dense<0.000000e+00> : vector<32xf32>
    %5 = vector.multi_reduction <add>, %3, %cst [0] : vector<64x32xf32> to vector<32xf32>
    %6 = vector.shape_cast %5 : vector<32xf32> to vector<1x32xf32>
    %7 = arith.addf %4, %6 : vector<1x32xf32>
    %c0_4 = arith.constant 0 : index
    %c0_5 = arith.constant 0 : index
    %8 = vector.load %arg5[%c0_4, %c0_5] : memref<1x32xf32, #tpu.memory_space<vmem>>, vector<1x32xf32>
    tpu.vector_store %arg5[%c0_4, %c0_5], %7 {strides = array<i32>} : memref<1x32xf32, #tpu.memory_space<vmem>>, vector<1x32xf32>,
    %c0_6 = arith.constant 0 : index
    %c0_7 = arith.constant 0 : index
    %9 = vector.load %arg6[%c0_6, %c0_7] : memref<1x32xf32, #tpu.memory_space<vmem>>, vector<1x32xf32>
    %10 = arith.mulf %3, %3 : vector<64x32xf32>
    %cst_8 = arith.constant dense<0.000000e+00> : vector<32xf32>
    %11 = vector.multi_reduction <add>, %10, %cst_8 [0] : vector<64x32xf32> to vector<32xf32>
    %12 = vector.shape_cast %11 : vector<32xf32> to vector<1x32xf32>
    %13 = arith.addf %9, %12 : vector<1x32xf32>
    %c0_9 = arith.constant 0 : index
    %c0_10 = arith.constant 0 : index
    %14 = vector.load %arg6[%c0_9, %c0_10] : memref<1x32xf32, #tpu.memory_space<vmem>>, vector<1x32xf32>
    tpu.vector_store %arg6[%c0_9, %c0_10], %13 {strides = array<i32>} : memref<1x32xf32, #tpu.memory_space<vmem>>, vector<1x32xf32>,
    %c0_i32_11 = arith.constant 0 : i32
    %15 = arith.cmpi eq, %arg0, %c0_i32_11 : i32
    %16 = arith.extui %15 : i1 to i32
    %c0_i32_12 = arith.constant 0 : i32
    %17 = arith.cmpi ne, %16, %c0_i32_12 : i32
    scf.if %17 {
      %c0_13 = arith.constant 0 : index
      %c0_14 = arith.constant 0 : index
      %18 = vector.load %arg5[%c0_13, %c0_14] : memref<1x32xf32, #tpu.memory_space<vmem>>, vector<1x32xf32>
      %cst_15 = arith.constant 6.400000e+01 : f32
      %19 = vector.broadcast %cst_15 : f32 to vector<1x32xf32>
      %20 = arith.divf %18, %19 : vector<1x32xf32>
      %c0_16 = arith.constant 0 : index
      %c0_17 = arith.constant 0 : index
      %21 = vector.load %arg6[%c0_16, %c0_17] : memref<1x32xf32, #tpu.memory_space<vmem>>, vector<1x32xf32>
      %cst_18 = arith.constant 6.400000e+01 : f32
      %22 = vector.broadcast %cst_18 : f32 to vector<1x32xf32>
      %23 = arith.mulf %22, %20 : vector<1x32xf32>
      %24 = arith.mulf %23, %20 : vector<1x32xf32>
      %25 = arith.subf %21, %24 : vector<1x32xf32>
      %cst_19 = arith.constant 6.400000e+01 : f32
      %cst_20 = arith.constant 1.000000e+00 : f32
      %26 = arith.subf %cst_19, %cst_20 : f32
      %27 = vector.broadcast %26 : f32 to vector<1x32xf32>
      %28 = arith.divf %25, %27 : vector<1x32xf32>
      %cst_21 = arith.constant 0.000000e+00 : f32
      %29 = vector.broadcast %cst_21 : f32 to vector<1x32xf32>
      %30 = arith.maximumf %28, %29 : vector<1x32xf32>
      %31 = math.sqrt %30 : vector<1x32xf32>
      %cst_22 = arith.constant 9.99999971E-10 : f32
      %32 = vector.broadcast %cst_22 : f32 to vector<1x32xf32>
      %33 = arith.cmpf olt, %31, %32 : vector<1x32xf32>
      %cst_23 = arith.constant 1.000000e+00 : f32
      %34 = vector.broadcast %cst_23 : f32 to vector<1x32xf32>
      %35 = arith.select %33, %34, %31 : vector<1x32xi1>, vector<1x32xf32>
      %c0_24 = arith.constant 0 : index
      %c0_25 = arith.constant 0 : index
      %36 = vector.load %arg2[%c0_24, %c0_25] : memref<1x32xf32, #tpu.memory_space<vmem>>, vector<1x32xf32>
      tpu.vector_store %arg2[%c0_24, %c0_25], %20 {strides = array<i32>} : memref<1x32xf32, #tpu.memory_space<vmem>>, vector<1x32xf32>,
      %c0_26 = arith.constant 0 : index
      %c0_27 = arith.constant 0 : index
      %37 = vector.load %arg3[%c0_26, %c0_27] : memref<1x32xf32, #tpu.memory_space<vmem>>, vector<1x32xf32>
      tpu.vector_store %arg3[%c0_26, %c0_27], %35 {strides = array<i32>} : memref<1x32xf32, #tpu.memory_space<vmem>>, vector<1x32xf32>,
      %cst_28 = arith.constant 1.000000e+00 : f32
      %38 = vector.broadcast %cst_28 : f32 to vector<1x32xf32>
      %39 = arith.divf %38, %35 : vector<1x32xf32>
      %c0_29 = arith.constant 0 : index
      %c0_30 = arith.constant 0 : index
      %40 = vector.load %arg4[%c0_29, %c0_30] : memref<1x32xf32, #tpu.memory_space<vmem>>, vector<1x32xf32>
      tpu.vector_store %arg4[%c0_29, %c0_30], %39 {strides = array<i32>} : memref<1x32xf32, #tpu.memory_space<vmem>>, vector<1x32xf32>,
    } else {
    }
    return
  }
  func.func @transform_0(%arg0: i32) -> (i32, i32) {
    %c0_i32 = arith.constant 0 : i32
    %c0_i32_0 = arith.constant 0 : i32
    return %arg0, %c0_i32 : i32, i32
  }
  func.func @transform_1(%arg0: i32) -> (i32, i32) {
    %c0_i32 = arith.constant 0 : i32
    %c0_i32_0 = arith.constant 0 : i32
    %c0_i32_1 = arith.constant 0 : i32
    return %c0_i32, %c0_i32_0 : i32, i32
  }
  func.func @transform_2(%arg0: i32) -> (i32, i32) {
    %c0_i32 = arith.constant 0 : i32
    %c0_i32_0 = arith.constant 0 : i32
    %c0_i32_1 = arith.constant 0 : i32
    return %c0_i32, %c0_i32_0 : i32, i32
  }
  func.func @transform_3(%arg0: i32) -> (i32, i32) {
    %c0_i32 = arith.constant 0 : i32
    %c0_i32_0 = arith.constant 0 : i32
    %c0_i32_1 = arith.constant 0 : i32
    return %c0_i32, %c0_i32_0 : i32, i32
  }
}

</mosaic_0001>

<llo_original>
// kernel: tpu_custom_call.1
$region0: #{tpu_custom_call.1}
  #allocation0 [shape = 'u32[]', space=smem, size = 0x4, offset = 0x4, fixed_abs, tag = 'smem constant byte address 0x4 - core index']
  #allocation1 [shape = 'u32[144,128]{1,0:T(1,128)}', space=vmem, size = 0x12000, scoped, tag = 'internal scratch']
  #allocation2 [shape = 'f32[1,32]{1,0:T(1,128)}', space=vmem, size = 0x200, scoped, tag = 'scratch operand']
  #allocation3 [shape = 'f32[1,32]{1,0:T(1,128)}', space=vmem, size = 0x200, scoped, tag = 'scratch operand']
  %s0 = inlined_call_operand.vmem [shape: f32[64,32], index: 0, kind: input, shape index: {}]
  %s1 = inlined_call_operand.hbm [shape: f32[1,32], index: 1, kind: output, shape index: {0}]
  %s2 = inlined_call_operand.hbm [shape: f32[1,32], index: 2, kind: output, shape index: {1}]
  %s3 = inlined_call_operand.hbm [shape: f32[1,32], index: 3, kind: output, shape index: {2}]
  %4 = xla_tuple %s1, %s2, %s3
  %s5 = sld [smem:[#allocation0]]
  $region38: #{tpu_custom_call.1} parent=0
    _
  %s7 = ssub.s32 1, %s5
  %s8 = scalar_select 0, %s7, %s5
  $region1: #{tpu_custom_call.1} parent=0
    #allocation4 [shape = 'u8[512]{0}', space=vmem, size = 0x400, scoped, tag = 'output window, operand 0, single buffered']
    #allocation5 [shape = 's32[1]{0}', space=sflag, size = 0x4, scoped, tag = 'scoped memory for tpu_custom_call.1']
    #allocation6 [shape = 'u8[512]{0}', space=vmem, size = 0x400, scoped, tag = 'output window, operand 1, single buffered']
    #allocation7 [shape = 's32[1]{0}', space=sflag, size = 0x4, scoped, tag = 'scoped memory for tpu_custom_call.1']
    #allocation8 [shape = 'u8[512]{0}', space=vmem, size = 0x400, scoped, tag = 'output window, operand 2, single buffered']
    %9 = vsyncpa [#allocation5], 0
    %10 = vsyncpa [#allocation7], 0
    // Predicated region
    $region2: #{tpu_custom_call.1} parent=1 // pred_check
      _
    $region3: #{tpu_custom_call.1} parent=1 // pred_check_branch
      %12 = sbr.rel (0) target = $region5
    $region4: #{tpu_custom_call.1} parent=1 // pred_region
      _
    $region5: #{tpu_custom_call.1} parent=1 // pred_fallthru
      _
    %p13 = scmp.eq.s32.totalorder 0, 0
    // Predicated region
    $region6: #{tpu_custom_call.1} parent=1 // pred_check
      %p14 = pneg %p13
    $region7: #{tpu_custom_call.1} parent=1 // pred_check_branch
      %16 = sbr.rel (%p14) target = $region9
    $region8: #{tpu_custom_call.1} parent=1 // pred_region
      %vm17 = vcmask 253952
      %18 = vst.msk [vmem:[#allocation2] sm:$0x1] %vm17, 0.0
      %19 = vst.msk [vmem:[#allocation3] sm:$0x1] %vm17, 0.0
    $region9: #{tpu_custom_call.1} parent=1 // pred_fallthru
      _
    %v20 = vld [vmem:[%s0] sm:$0xff]
    %v21 = vld [vmem:[%s0 + $0x8] sm:$0xff]
    %v22 = vld [vmem:[%s0 + $0x10] sm:$0xff]
    %v23 = vld [vmem:[%s0 + $0x18] sm:$0xff]
    %v24 = vld [vmem:[%s0 + $0x20] sm:$0xff]
    %v25 = vld [vmem:[%s0 + $0x28] sm:$0xff]
    %v26 = vld [vmem:[%s0 + $0x30] sm:$0xff]
    %v27 = vld [vmem:[%s0 + $0x38] sm:$0xff]
    %v28 = vld [vmem:[#allocation2] sm:$0x1]
    %vm29 = vcmask 261120
    %v30 = vsel %vm29, %v20, 0.0
    %v31 = vsel %vm29, %v21, 0.0
    %v32 = vadd.f32 %v30, %v31
    %v33 = vsel %vm29, %v22, 0.0
    %v34 = vadd.f32 %v32, %v33
    %v35 = vsel %vm29, %v23, 0.0
    %v36 = vadd.f32 %v34, %v35
    %v37 = vsel %vm29, %v24, 0.0
    %v38 = vadd.f32 %v36, %v37
    %v39 = vsel %vm29, %v25, 0.0
    %v40 = vadd.f32 %v38, %v39
    %v41 = vsel %vm29, %v26, 0.0
    %v42 = vadd.f32 %v40, %v41
    %v43 = vsel %vm29, %v27, 0.0
    %v44 = vadd.f32 %v42, %v43
    %v45 = vrot.slane %v44, 4
    %v46 = vadd.f32 %v44, %v45
    %v47 = vrot.slane %v46, 2
    %v48 = vadd.f32 %v46, %v47
    %v49 = vrot.slane %v48, 1
    %v50 = vadd.f32 %v48, %v49
    %v51 = vadd.f32 %v28, %v50
    %vm52 = vcmask 253952
    %53 = vst.msk [vmem:[#allocation2] sm:$0x1] %vm52, %v51
    %v54 = vld [vmem:[#allocation3] sm:$0x1]
    %v55 = vmul.f32 %v20, %v20
    %v56 = vmul.f32 %v21, %v21
    %v57 = vmul.f32 %v22, %v22
    %v58 = vmul.f32 %v23, %v23
    %v59 = vmul.f32 %v24, %v24
    %v60 = vmul.f32 %v25, %v25
    %v61 = vmul.f32 %v26, %v26
    %v62 = vmul.f32 %v27, %v27
    %v63 = vsel %vm29, %v55, 0.0
    %v64 = vsel %vm29, %v56, 0.0
    %v65 = vadd.f32 %v63, %v64
    %v66 = vsel %vm29, %v57, 0.0
    %v67 = vadd.f32 %v65, %v66
    %v68 = vsel %vm29, %v58, 0.0
    %v69 = vadd.f32 %v67, %v68
    %v70 = vsel %vm29, %v59, 0.0
    %v71 = vadd.f32 %v69, %v70
    %v72 = vsel %vm29, %v60, 0.0
    %v73 = vadd.f32 %v71, %v72
    %v74 = vsel %vm29, %v61, 0.0
    %v75 = vadd.f32 %v73, %v74
    %v76 = vsel %vm29, %v62, 0.0
    %v77 = vadd.f32 %v75, %v76
    %v78 = vrot.slane %v77, 4
    %v79 = vadd.f32 %v77, %v78
    %v80 = vrot.slane %v79, 2
    %v81 = vadd.f32 %v79, %v80
    %v82 = vrot.slane %v81, 1
    %v83 = vadd.f32 %v81, %v82
    %v84 = vadd.f32 %v54, %v83
    %85 = vst.msk [vmem:[#allocation3] sm:$0x1] %vm52, %v84
    // Predicated region
    $region10: #{tpu_custom_call.1} parent=1 // pred_check
      %p86 = pneg %p13
    $region11: #{tpu_custom_call.1} parent=1 // pred_check_branch
      %88 = sbr.rel (%p86) target = $region13
    $region12: #{tpu_custom_call.1} parent=1 // pred_region
      %v89 = vld [vmem:[#allocation2] sm:$0x1]
      %v90 = vrcp.pop 64.0
      %v91 = vmul.f32 %v89, %v90
      %v92 = vld [vmem:[#allocation3] sm:$0x1]
      %v93 = vmul.f32 %v91, 64.0
      %v94 = vmul.f32 %v93, %v91
      %v95 = vsub.f32 %v92, %v94
      %v96 = vrcp.pop 63.0
      %v97 = vmul.f32 %v95, %v96
      %v98 = vmax.f32 %v97, 0.0
      %v99 = vrsqrt.pop %v98
      %v100 = vmul.f32 %v98, %v99
      %vm101 = vcmp.eq.f32.partialorder %v98, inf
      %v102 = vsel %vm101, %v98, %v100
      %vm103 = vcmp.eq.f32.partialorder %v98, 0.0
      %v104 = vand.u32 %v98, 2147483648
      %v105 = vsel %vm103, %v104, %v102
      %vm106 = vcmp.lt.f32.partialorder %v105, 1e-09
      %v107 = vsel %vm106, 1.0, %v105
      %108 = vst.msk [vmem:[#allocation4] sm:$0x1] %vm52, %v91
      %109 = vst.msk [vmem:[#allocation6] sm:$0x1] %vm52, %v107
      %v110 = vrcp.pop %v107
      %v111 = vmul.f32 1.0, %v110
      %112 = vst.msk [vmem:[#allocation8] sm:$0x1] %vm52, %v111
    $region13: #{tpu_custom_call.1} parent=1 // pred_fallthru
      _
    // Predicated region
    $region14: #{tpu_custom_call.1} parent=1 // pred_check
      _
    $region15: #{tpu_custom_call.1} parent=1 // pred_check_branch
      %114 = sbr.rel (0) target = $region17
    $region16: #{tpu_custom_call.1} parent=1 // pred_region
      %s116 = ssub.s32 16, 16
      %117 = vsyncadd [#allocation5], %s116
      %s119 = sshll.u32 [#allocation4], 4
      %s120 = int_to_ptr.vmem [resolvable:$true] %s119
      %122 = dma.vmem_to_hbm [thread:$0]  %s120, 16, %s1, [#allocation5]
    $region17: #{tpu_custom_call.1} parent=1 // pred_fallthru
      _
    // Predicated region
    $region18: #{tpu_custom_call.1} parent=1 // pred_check
      _
    $region19: #{tpu_custom_call.1} parent=1 // pred_check_branch
      %124 = sbr.rel (0) target = $region21
    $region20: #{tpu_custom_call.1} parent=1 // pred_region
      %s126 = ssub.s32 16, 16
      %127 = vsyncadd [#allocation7], %s126
      %s129 = sshll.u32 [#allocation6], 4
      %s130 = int_to_ptr.vmem [resolvable:$true] %s129
      %132 = dma.vmem_to_hbm [thread:$0]  %s130, 16, %s2, [#allocation7]
    $region21: #{tpu_custom_call.1} parent=1 // pred_fallthru
      _
    // Predicated region
    $region22: #{tpu_custom_call.1} parent=1 // pred_check
      _
    $region23: #{tpu_custom_call.1} parent=1 // pred_check_branch
      %134 = sbr.rel (0) target = $region25
    $region24: #{tpu_custom_call.1} parent=1 // pred_region
      %s136 = ssub.s32 16, 16
      %137 = vsyncadd [#allocation7], %s136
      %s139 = sshll.u32 [#allocation8], 4
      %s140 = int_to_ptr.vmem [resolvable:$true] %s139
      %142 = dma.vmem_to_hbm [thread:$0]  %s140, 16, %s3, [#allocation7]
    $region25: #{tpu_custom_call.1} parent=1 // pred_fallthru
      _
    // Predicated region
    $region26: #{tpu_custom_call.1} parent=1 // pred_check
      _
    $region27: #{tpu_custom_call.1} parent=1 // pred_check_branch
      %144 = sbr.rel (0) target = $region29
    $region28: #{tpu_custom_call.1} parent=1 // pred_region
      %145 = dma.done [#allocation5], 16
    $region29: #{tpu_custom_call.1} parent=1 // pred_fallthru
      _
    // Predicated region
    $region30: #{tpu_custom_call.1} parent=1 // pred_check
      _
    $region31: #{tpu_custom_call.1} parent=1 // pred_check_branch
      %147 = sbr.rel (0) target = $region33
    $region32: #{tpu_custom_call.1} parent=1 // pred_region
      %148 = dma.done [#allocation7], 16
    $region33: #{tpu_custom_call.1} parent=1 // pred_fallthru
      _
    // Predicated region
    $region34: #{tpu_custom_call.1} parent=1 // pred_check
      _
    $region35: #{tpu_custom_call.1} parent=1 // pred_check_branch
      %150 = sbr.rel (0) target = $region37
    $region36: #{tpu_custom_call.1} parent=1 // pred_region
      %151 = dma.done [#allocation7], 16
    $region37: #{tpu_custom_call.1} parent=1 // pred_fallthru
      _
    %152 = vsyncpa [#allocation5], 1
    %153 = vsyncpa [#allocation7], 1

</llo_original>
